<compile_context>
chip_gen: v7x
topology: tpu7x:2x2x1
jax: 0.10.0
libtpu: 0.0.40
codegen_flags: <defaults>
</compile_context>

<pallas_src>
import functools

import jax
import jax.numpy as jnp
from jax.experimental import pallas as pl
from jax.experimental.pallas import tpu as pltpu

DT = 0.05
STATE_DIM = 2
HIDDEN = 32
BATCH = 16
PACK_LANES = 128

# Lane offsets inside the packed (HIDDEN, PACK_LANES) parameter block.
_C_W1X = 32   # column holding w1[0, :]   (H,)
_C_W1Y = 33   # column holding w1[1, :]
_C_B1 = 34    # column holding b1
_C_B2 = 35    # column holding b2
_C_W3X = 36   # column holding dt * w3[:, 0]
_C_W3Y = 37   # column holding dt * w3[:, 1]
_C_B3 = 38    # rows 0/1 hold dt * b3[0], dt * b3[1]


# ---------------------------------------------------------------------------
# Kernels
# ---------------------------------------------------------------------------
def _load_params(p_ref):
    """Static ref-view slices of the packed (H, 128) parameter block (free)."""
    w2 = p_ref[:, 0:HIDDEN]                     # (H, H)  row = out, col = in
    w1x = p_ref[:, _C_W1X:_C_W1X + 1]           # (H, 1)
    w1y = p_ref[:, _C_W1Y:_C_W1Y + 1]           # (H, 1)
    b1 = p_ref[:, _C_B1:_C_B1 + 1]              # (H, 1)
    b2 = p_ref[:, _C_B2:_C_B2 + 1]              # (H, 1)
    w3x = p_ref[:, _C_W3X:_C_W3X + 1]           # (H, 1)  already scaled by dt
    w3y = p_ref[:, _C_W3Y:_C_W3Y + 1]           # (H, 1)  already scaled by dt
    b3x = p_ref[0:1, _C_B3:_C_B3 + 1]           # (1, 1)  dt * b3[0]
    b3y = p_ref[1:2, _C_B3:_C_B3 + 1]           # (1, 1)  dt * b3[1]
    return w2, w1x, w1y, b1, b2, w3x, w3y, b3x, b3y


def _euler_delta(x, y, w2, w1x, w1y, b1, b2, w3x, w3y, b3x, b3y, *, l2_bf16):
    """dt * f(x, y) for x, y of shape (1, B); returns (dx, dy) each (1, B)."""
    # Layer 1: K = 2 contraction as VPU broadcast FMAs (no MXU round trip).
    h1 = jnp.tanh(w1x * x + w1y * y + b1)                       # (H, B)
    # Layer 2: (H, H) @ (H, B) on the MXU, f32 accumulation.
    if l2_bf16:
        pre2 = jnp.dot(w2.astype(jnp.bfloat16), h1.astype(jnp.bfloat16),
                       preferred_element_type=jnp.float32)
    else:
        pre2 = jnp.dot(w2, h1, preferred_element_type=jnp.float32,
                       precision=jax.lax.Precision.HIGHEST)
    h2 = jnp.tanh(pre2 + b2)                                    # (H, B)
    # Layer 3: M = 2 output rows -> VPU multiply + XLU sublane reduction
    # (dt already folded into w3/b3 at parameter-prep time).
    dx = jnp.sum(w3x * h2, axis=0, keepdims=True) + b3x         # (1, B)
    dy = jnp.sum(w3y * h2, axis=0, keepdims=True) + b3y         # (1, B)
    return dx, dy


def _dynamics_step_kernel(xy_ref, p_ref, out_ref, *, l2_bf16):
    """One Euler step.  xy_ref/out_ref: (2, B); p_ref: packed (H, 128)."""
    w2, w1x, w1y, b1, b2, w3x, w3y, b3x, b3y = _load_params(p_ref)
    x = xy_ref[0:1, :].astype(jnp.float32)                      # (1, B)
    y = xy_ref[1:2, :].astype(jnp.float32)                      # (1, B)
    dx, dy = _euler_delta(x, y, w2, w1x, w1y, b1, b2, w3x, w3y, b3x, b3y,
                          l2_bf16=l2_bf16)
    out_ref[0:1, :] = (x + dx).astype(out_ref.dtype)
    out_ref[1:2, :] = (y + dy).astype(out_ref.dtype)


def _dynamics_rollout_kernel(xy_ref, p_ref, out_ref, *, n_steps, l2_bf16):
    """T fused Euler steps: weights + state stay resident in VMEM/vregs."""
    w2, w1x, w1y, b1, b2, w3x, w3y, b3x, b3y = _load_params(p_ref)
    x0 = xy_ref[0:1, :].astype(jnp.float32)
    y0 = xy_ref[1:2, :].astype(jnp.float32)

    def body(_, carry):
        x, y = carry
        dx, dy = _euler_delta(x, y, w2, w1x, w1y, b1, b2, w3x, w3y, b3x, b3y,
                              l2_bf16=l2_bf16)
        return (x + dx, y + dy)

    x_t, y_t = jax.lax.fori_loop(0, n_steps, body, (x0, y0),
                                 unroll=bool(n_steps <= 16))
    out_ref[0:1, :] = x_t.astype(out_ref.dtype)
    out_ref[1:2, :] = y_t.astype(out_ref.dtype)


# ---------------------------------------------------------------------------
# Wrappers
# ---------------------------------------------------------------------------
def dynamics_step(xy, packed, *, lane_tile=16384, single_call_max=2048,
                  l2_bf16_large=True):
    """One Euler step in the native (2, B) layout -> (2, B).

    Small/medium B: a single no-grid pallas_call (whole problem is one VMEM
    tile; per-grid-step overhead would dominate).  Large B: a 1-D "parallel"
    grid over VMEM-filling lane tiles (>= 2 steps so v7x's 2 TCs can split).
    """
    d, b = xy.shape
    assert d == STATE_DIM
    if b <= single_call_max:
        kernel = functools.partial(_dynamics_step_kernel, l2_bf16=False)
        return pl.pallas_call(
            kernel,
            out_shape=jax.ShapeDtypeStruct((d, b), xy.dtype),
        )(xy, packed)

    # Gridded large-batch path.
    tile = min(lane_tile, pl.cdiv(pl.cdiv(b, 2), 128) * 128)
    tile = max(tile, 128)
    grid = pl.cdiv(b, tile)
    padded = grid * tile
    if padded != b:
        xy = jnp.pad(xy, ((0, 0), (0, padded - b)))
    kernel = functools.partial(_dynamics_step_kernel, l2_bf16=l2_bf16_large)
    h = packed.shape[0]
    out = pl.pallas_call(
        kernel,
        out_shape=jax.ShapeDtypeStruct((d, padded), xy.dtype),
        grid=(grid,),
        in_specs=[
            pl.BlockSpec((d, tile), lambda i: (0, i)),          # state tile
            pl.BlockSpec((h, PACK_LANES), lambda i: (0, 0)),    # packed params
        ],
        out_specs=pl.BlockSpec((d, tile), lambda i: (0, i)),
        compiler_params=pltpu.CompilerParams(
            dimension_semantics=("parallel",),
            vmem_limit_bytes=32 * 1024 * 1024),                 # v5e headroom
    )(xy, packed)
    return out[:, :b]


def dynamics_rollout(xy, packed, n_steps, *, l2_bf16=False):
    """n_steps fused Euler steps in (2, B) layout, single kernel launch."""
    d, b = xy.shape
    assert d == STATE_DIM
    kernel = functools.partial(_dynamics_rollout_kernel,
                               n_steps=int(n_steps), l2_bf16=l2_bf16)
    return pl.pallas_call(
        kernel,
        out_shape=jax.ShapeDtypeStruct((d, b), xy.dtype),
    )(xy, packed)


def dynamics_forward(xy_b2, packed, **kw):
    """Torch-input-layout wrapper: (B, 2) -> (B, 2) next state."""
    return dynamics_step(xy_b2.T, packed, **kw).T


def dynamics_forward_torch_layout(xy_b2, packed, **kw):
    """Exact torch output: cat([x1, y1], dim=1) -> (1, 2B)."""
    return dynamics_step(xy_b2.T, packed, **kw).reshape(1, -1)


# ---------------------------------------------------------------------------
# Parameters, packing, reference
# ---------------------------------------------------------------------------
def init_params(key, hidden=HIDDEN, dim=STATE_DIM):
    """MLP params in the math layout: h = x @ W + b (i.e. nn.Linear weight.T)."""
    ks = jax.random.split(key, 6)
    scale = lambda fan_in: 1.0 / jnp.sqrt(jnp.float32(fan_in))
    return {
        "w1": jax.random.normal(ks[0], (dim, hidden), jnp.float32) * scale(dim),
        "b1": jax.random.normal(ks[1], (1, hidden), jnp.float32) * 0.1,
        "w2": jax.random.normal(ks[2], (hidden, hidden), jnp.float32) * scale(hidden),
        "b2": jax.random.normal(ks[3], (1, hidden), jnp.float32) * 0.1,
        "w3": jax.random.normal(ks[4], (hidden, dim), jnp.float32) * scale(hidden),
        "b3": jax.random.normal(ks[5], (1, dim), jnp.float32) * 0.1,
    }


def prepare_params(params, *, dt=DT):
    """One-time transform: fold dt into layer 3 and pack everything into a
    single (HIDDEN, 128) f32 block (one DMA descriptor instead of six)."""
    w1, b1 = params["w1"], params["b1"]          # (2, H), (1, H)
    w2, b2 = params["w2"], params["b2"]          # (H, H), (1, H)
    w3, b3 = params["w3"], params["b3"]          # (H, 2), (1, 2)
    assert w2.shape == (HIDDEN, HIDDEN)
    p = jnp.zeros((HIDDEN, PACK_LANES), jnp.float32)
    p = p.at[:, 0:HIDDEN].set(w2.T.astype(jnp.float32))          # row=out, col=in
    p = p.at[:, _C_W1X].set(w1[0, :].astype(jnp.float32))
    p = p.at[:, _C_W1Y].set(w1[1, :].astype(jnp.float32))
    p = p.at[:, _C_B1].set(b1[0, :].astype(jnp.float32))
    p = p.at[:, _C_B2].set(b2[0, :].astype(jnp.float32))
    p = p.at[:, _C_W3X].set((dt * w3[:, 0]).astype(jnp.float32))
    p = p.at[:, _C_W3Y].set((dt * w3[:, 1]).astype(jnp.float32))
    p = p.at[0, _C_B3].set(jnp.float32(dt) * b3[0, 0])
    p = p.at[1, _C_B3].set(jnp.float32(dt) * b3[0, 1])
    return p


def _reference(xy, p, dt=DT):
    """Pure-JAX reference (precision pinned so f32 comparison is meaningful)."""
    hp = jax.lax.Precision.HIGHEST
    h1 = jnp.tanh(jnp.dot(xy, p["w1"], precision=hp) + p["b1"])
    h2 = jnp.tanh(jnp.dot(h1, p["w2"], precision=hp) + p["b2"])
    return xy + dt * (jnp.dot(h2, p["w3"], precision=hp) + p["b3"])


# ---------------------------------------------------------------------------
# Demo / self-check
# ---------------------------------------------------------------------------
if __name__ == "__main__":
    key = jax.random.PRNGKey(0)
    k_x, k_p, k_big = jax.random.split(key, 3)
    params = init_params(k_p)
    packed = prepare_params(params, dt=DT)       # one-time pack + dt fold

    # --- single Euler step, small batch, torch-compatible layouts ----------
    xy = jax.random.normal(k_x, (BATCH, STATE_DIM), jnp.float32)
    ref = _reference(xy, params, dt=DT)

    out = jax.block_until_ready(dynamics_forward(xy, packed))
    assert out.shape == xy.shape and out.dtype == xy.dtype
    assert jnp.allclose(out, ref, atol=1e-5, rtol=1e-5), "step mismatch"

    out_torch = jax.block_until_ready(dynamics_forward_torch_layout(xy, packed))
    ref_torch = jnp.concatenate([ref[:, 0], ref[:, 1]])[None, :]   # (1, 2B)
    assert out_torch.shape == (1, 2 * BATCH)
    assert jnp.allclose(out_torch, ref_torch, atol=1e-5, rtol=1e-5), \
        "torch-layout mismatch"

    # --- fused T-step rollout (one launch, weights resident in VMEM) -------
    T = 8
    roll = jax.block_until_ready(dynamics_rollout(xy.T, packed, T))
    ref_roll = xy
    for _ in range(T):
        ref_roll = _reference(ref_roll, params, dt=DT)
    assert jnp.allclose(roll.T, ref_roll, atol=1e-4, rtol=1e-4), \
        "rollout mismatch"

    # --- gridded large-batch path (exercised with a small tile for test) ---
    xy_big = jax.random.normal(k_big, (STATE_DIM, 520), jnp.float32)  # (2, B)
    out_big = jax.block_until_ready(
        dynamics_step(xy_big, packed, lane_tile=256, single_call_max=128))
    ref_big = _reference(xy_big.T, params, dt=DT).T
    assert out_big.shape == xy_big.shape
    assert jnp.allclose(out_big, ref_big, atol=2e-3, rtol=2e-3), \
        "gridded (bf16 layer-2) mismatch"

    print("KERNEL_OK")
</pallas_src>

<mosaic_0001>
module attributes {stable_mosaic.version = 11 : i64} {
  func.func @_dynamics_step_kernel(%arg0: memref<2x16xf32, #tpu.memory_space<vmem>>, %arg1: memref<32x128xf32, #tpu.memory_space<vmem>>, %arg2: memref<2x16xf32, #tpu.memory_space<vmem>>) attributes {dimension_semantics = [], scalar_prefetch = 0 : i64, scratch_operands = 0 : i64, tpu.core_type = #tpu.core_type<tc>} {
    %c0 = arith.constant 0 : index
    %c0_0 = arith.constant 0 : index
    %0 = vector.load %arg1[%c0, %c0_0] : memref<32x128xf32, #tpu.memory_space<vmem>>, vector<32x32xf32>
    %c0_1 = arith.constant 0 : index
    %c32 = arith.constant 32 : index
    %1 = vector.load %arg1[%c0_1, %c32] : memref<32x128xf32, #tpu.memory_space<vmem>>, vector<32x1xf32>
    %c0_2 = arith.constant 0 : index
    %c33 = arith.constant 33 : index
    %2 = vector.load %arg1[%c0_2, %c33] : memref<32x128xf32, #tpu.memory_space<vmem>>, vector<32x1xf32>
    %c0_3 = arith.constant 0 : index
    %c34 = arith.constant 34 : index
    %3 = vector.load %arg1[%c0_3, %c34] : memref<32x128xf32, #tpu.memory_space<vmem>>, vector<32x1xf32>
    %c0_4 = arith.constant 0 : index
    %c35 = arith.constant 35 : index
    %4 = vector.load %arg1[%c0_4, %c35] : memref<32x128xf32, #tpu.memory_space<vmem>>, vector<32x1xf32>
    %c0_5 = arith.constant 0 : index
    %c36 = arith.constant 36 : index
    %5 = vector.load %arg1[%c0_5, %c36] : memref<32x128xf32, #tpu.memory_space<vmem>>, vector<32x1xf32>
    %c0_6 = arith.constant 0 : index
    %c37 = arith.constant 37 : index
    %6 = vector.load %arg1[%c0_6, %c37] : memref<32x128xf32, #tpu.memory_space<vmem>>, vector<32x1xf32>
    %c0_7 = arith.constant 0 : index
    %c38 = arith.constant 38 : index
    %7 = vector.load %arg1[%c0_7, %c38] : memref<32x128xf32, #tpu.memory_space<vmem>>, vector<1x1xf32>
    %c1 = arith.constant 1 : index
    %c38_8 = arith.constant 38 : index
    %8 = vector.load %arg1[%c1, %c38_8] : memref<32x128xf32, #tpu.memory_space<vmem>>, vector<1x1xf32>
    %c0_9 = arith.constant 0 : index
    %c0_10 = arith.constant 0 : index
    %9 = vector.load %arg0[%c0_9, %c0_10] : memref<2x16xf32, #tpu.memory_space<vmem>>, vector<1x16xf32>
    %c1_11 = arith.constant 1 : index
    %c0_12 = arith.constant 0 : index
    %10 = vector.load %arg0[%c1_11, %c0_12] : memref<2x16xf32, #tpu.memory_space<vmem>>, vector<1x16xf32>
    %11 = vector.broadcast %1 : vector<32x1xf32> to vector<32x16xf32>
    %12 = vector.broadcast %9 : vector<1x16xf32> to vector<32x16xf32>
    %13 = arith.mulf %11, %12 : vector<32x16xf32>
    %14 = vector.broadcast %2 : vector<32x1xf32> to vector<32x16xf32>
    %15 = vector.broadcast %10 : vector<1x16xf32> to vector<32x16xf32>
    %16 = arith.mulf %14, %15 : vector<32x16xf32>
    %17 = arith.addf %13, %16 : vector<32x16xf32>
    %18 = vector.broadcast %3 : vector<32x1xf32> to vector<32x16xf32>
    %19 = arith.addf %17, %18 : vector<32x16xf32>
    %20 = math.tanh %19 : vector<32x16xf32>
    %cst = arith.constant dense<0.000000e+00> : vector<32x16xf32>
    %21 = tpu.matmul %0, %20, %cst {dimension_numbers = #tpu.dot_dimension_numbers<[1], [0], [0], [1], [0, 0, 1, 1], [], []>, precision = #tpu.contract_precision<fp32>} : vector<32x32xf32>, vector<32x16xf32>, vector<32x16xf32> -> vector<32x16xf32>
    %22 = vector.broadcast %4 : vector<32x1xf32> to vector<32x16xf32>
    %23 = arith.addf %21, %22 : vector<32x16xf32>
    %24 = math.tanh %23 : vector<32x16xf32>
    %25 = vector.broadcast %5 : vector<32x1xf32> to vector<32x16xf32>
    %26 = arith.mulf %25, %24 : vector<32x16xf32>
    %cst_13 = arith.constant dense<0.000000e+00> : vector<16xf32>
    %27 = vector.multi_reduction <add>, %26, %cst_13 [0] : vector<32x16xf32> to vector<16xf32>
    %28 = vector.shape_cast %27 : vector<16xf32> to vector<1x16xf32>
    %29 = vector.broadcast %7 : vector<1x1xf32> to vector<1x16xf32>
    %30 = arith.addf %28, %29 : vector<1x16xf32>
    %31 = vector.broadcast %6 : vector<32x1xf32> to vector<32x16xf32>
    %32 = arith.mulf %31, %24 : vector<32x16xf32>
    %cst_14 = arith.constant dense<0.000000e+00> : vector<16xf32>
    %33 = vector.multi_reduction <add>, %32, %cst_14 [0] : vector<32x16xf32> to vector<16xf32>
    %34 = vector.shape_cast %33 : vector<16xf32> to vector<1x16xf32>
    %35 = vector.broadcast %8 : vector<1x1xf32> to vector<1x16xf32>
    %36 = arith.addf %34, %35 : vector<1x16xf32>
    %37 = arith.addf %9, %30 : vector<1x16xf32>
    %c0_15 = arith.constant 0 : index
    %c0_16 = arith.constant 0 : index
    %38 = vector.load %arg2[%c0_15, %c0_16] : memref<2x16xf32, #tpu.memory_space<vmem>>, vector<1x16xf32>
    tpu.vector_store %arg2[%c0_15, %c0_16], %37 {strides = array<i32>} : memref<2x16xf32, #tpu.memory_space<vmem>>, vector<1x16xf32>,
    %39 = arith.addf %10, %36 : vector<1x16xf32>
    %c1_17 = arith.constant 1 : index
    %c0_18 = arith.constant 0 : index
    %40 = vector.load %arg2[%c1_17, %c0_18] : memref<2x16xf32, #tpu.memory_space<vmem>>, vector<1x16xf32>
    tpu.vector_store %arg2[%c1_17, %c0_18], %39 {strides = array<i32>} : memref<2x16xf32, #tpu.memory_space<vmem>>, vector<1x16xf32>,
    return
  }
}

</mosaic_0001>

<llo_original>
// kernel: tpu_custom_call.1
$region0: #{tpu_custom_call.1}
  #allocation0 [shape = 'u32[]', space=smem, size = 0x4, offset = 0x4, fixed_abs, tag = 'smem constant byte address 0x4 - core index']
  #allocation1 [shape = 'u32[144,128]{1,0:T(1,128)}', space=vmem, size = 0x12000, scoped, tag = 'internal scratch']
  %s0 = inlined_call_operand.hbm [shape: f32[2,16], index: 0, kind: input, shape index: {}]
  %s1 = inlined_call_operand.hbm [shape: f32[32,128], index: 1, kind: input, shape index: {}]
  %s2 = inlined_call_operand.hbm [shape: f32[2,16], index: 2, kind: output, shape index: {}]
  %s3 = sld [smem:[#allocation0]]
  $region26: #{tpu_custom_call.1} parent=0
    _
  %s5 = ssub.s32 1, %s3
  %s6 = scalar_select 0, %s5, %s3
  $region1: #{tpu_custom_call.1} parent=0
    #allocation2 [shape = 'u8[1024]{0}', space=vmem, size = 0x400, scoped, tag = 'input window, operand 0, single buffered']
    #allocation3 [shape = 's32[1]{0}', space=sflag, size = 0x4, scoped, tag = 'scoped memory for tpu_custom_call.1']
    #allocation4 [shape = 's32[1]{0}', space=sflag, size = 0x4, scoped, tag = 'scoped memory for tpu_custom_call.1']
    #allocation5 [shape = 'u8[16384]{0}', space=vmem, size = 0x4000, scoped, tag = 'input window, operand 1, single buffered']
    #allocation6 [shape = 's32[1]{0}', space=sflag, size = 0x4, scoped, tag = 'scoped memory for tpu_custom_call.1']
    #allocation7 [shape = 'u8[1024]{0}', space=vmem, size = 0x400, scoped, tag = 'output window, operand 0, single buffered']
    %7 = vsyncpa [#allocation3], 0
    %8 = vsyncpa [#allocation6], 0
    %9 = vsyncpa [#allocation4], 0
    // Predicated region
    $region2: #{tpu_custom_call.1} parent=1 // pred_check
      _
    $region3: #{tpu_custom_call.1} parent=1 // pred_check_branch
      %11 = sbr.rel (0) target = $region5
    $region4: #{tpu_custom_call.1} parent=1 // pred_region
      %s13 = ssub.s32 32, 32
      %14 = vsyncadd [#allocation3], %s13
      %s16 = sshll.u32 [#allocation2], 4
      %s17 = int_to_ptr.vmem [resolvable:$true] %s16
      %19 = dma.hbm_to_vmem [thread:$0]  %s0, 32, %s17, [#allocation3]
    $region5: #{tpu_custom_call.1} parent=1 // pred_fallthru
      _
    // Predicated region
    $region6: #{tpu_custom_call.1} parent=1 // pred_check
      _
    $region7: #{tpu_custom_call.1} parent=1 // pred_check_branch
      %21 = sbr.rel (0) target = $region9
    $region8: #{tpu_custom_call.1} parent=1 // pred_region
      %s23 = ssub.s32 512, 512
      %24 = vsyncadd [#allocation6], %s23
      %s25 = sshll.u32 [#allocation5], 4
      %s26 = int_to_ptr.vmem [resolvable:$true] %s25
      %31 = dma.hbm_to_vmem [thread:$0]  %s1, 512, %s26, [#allocation6], 128, 128, 8
    $region9: #{tpu_custom_call.1} parent=1 // pred_fallthru
      _
    // Predicated region
    $region10: #{tpu_custom_call.1} parent=1 // pred_check
      _
    $region11: #{tpu_custom_call.1} parent=1 // pred_check_branch
      %33 = sbr.rel (0) target = $region13
    $region12: #{tpu_custom_call.1} parent=1 // pred_region
      %34 = dma.done [#allocation3], 32
    $region13: #{tpu_custom_call.1} parent=1 // pred_fallthru
      _
    // Predicated region
    $region14: #{tpu_custom_call.1} parent=1 // pred_check
      _
    $region15: #{tpu_custom_call.1} parent=1 // pred_check_branch
      %36 = sbr.rel (0) target = $region17
    $region16: #{tpu_custom_call.1} parent=1 // pred_region
      %37 = dma.done [#allocation6], 512
    $region17: #{tpu_custom_call.1} parent=1 // pred_fallthru
      _
    %v38 = vld [vmem:[#allocation5] sm:$0xff]
    %v39 = vld [vmem:[#allocation5 + $0x8] sm:$0xff]
    %v40 = vld [vmem:[#allocation5 + $0x10] sm:$0xff]
    %v41 = vld [vmem:[#allocation5 + $0x18] sm:$0xff]
    %v42 = vld [vmem:[#allocation5] sm:$0x1]
    %v43 = vld [vmem:[#allocation5 + $0x1] sm:$0x1]
    %v44 = vld [vmem:[#allocation2] sm:$0x1]
    %v45 = vld [vmem:[#allocation2 + $0x1] sm:$0x1]
    %47 = vset.pattern.permute.xlu0 32
    %48 = vperm.xlu0 %47, %v38
    %v49 = vpop.permute.xlu0 %48
    %52 = vset.pattern.permute.xlu0 32
    %53 = vperm.xlu0 %52, %v39
    %v54 = vpop.permute.xlu0 %53
    %57 = vset.pattern.permute.xlu0 32
    %58 = vperm.xlu0 %57, %v40
    %v59 = vpop.permute.xlu0 %58
    %62 = vset.pattern.permute.xlu0 32
    %63 = vperm.xlu0 %62, %v41
    %v64 = vpop.permute.xlu0 %63
    %v66 = vlaneseq
    %v67 = vshrl.u32 %v66, 7
    %v68 = vsub.s32 0, %v67
    %v69 = vrot.slane %v44, %v68
    %v70 = vmul.f32 %v49, %v69
    %v71 = vmul.f32 %v54, %v69
    %v72 = vmul.f32 %v59, %v69
    %v73 = vmul.f32 %v64, %v69
    %74 = vset.pattern.permute.xlu0 33
    %75 = vperm.xlu0 %74, %v38
    %v76 = vpop.permute.xlu0 %75
    %78 = vset.pattern.permute.xlu0 33
    %79 = vperm.xlu0 %78, %v39
    %v80 = vpop.permute.xlu0 %79
    %82 = vset.pattern.permute.xlu0 33
    %83 = vperm.xlu0 %82, %v40
    %v84 = vpop.permute.xlu0 %83
    %86 = vset.pattern.permute.xlu0 33
    %87 = vperm.xlu0 %86, %v41
    %v88 = vpop.permute.xlu0 %87
    %v90 = vlaneseq
    %v91 = vshrl.u32 %v90, 7
    %v92 = vsub.s32 0, %v91
    %v93 = vrot.slane %v45, %v92
    %v94 = vmul.f32 %v76, %v93
    %v95 = vmul.f32 %v80, %v93
    %v96 = vmul.f32 %v84, %v93
    %v97 = vmul.f32 %v88, %v93
    %v98 = vadd.f32 %v70, %v94
    %v99 = vadd.f32 %v71, %v95
    %v100 = vadd.f32 %v72, %v96
    %v101 = vadd.f32 %v73, %v97
    %102 = vset.pattern.permute.xlu0 34
    %103 = vperm.xlu0 %102, %v38
    %v104 = vpop.permute.xlu0 %103
    %106 = vset.pattern.permute.xlu0 34
    %107 = vperm.xlu0 %106, %v39
    %v108 = vpop.permute.xlu0 %107
    %110 = vset.pattern.permute.xlu0 34
    %111 = vperm.xlu0 %110, %v40
    %v112 = vpop.permute.xlu0 %111
    %114 = vset.pattern.permute.xlu0 34
    %115 = vperm.xlu0 %114, %v41
    %v116 = vpop.permute.xlu0 %115
    %v118 = vadd.f32 %v98, %v104
    %v119 = vadd.f32 %v99, %v108
    %v120 = vadd.f32 %v100, %v112
    %v121 = vadd.f32 %v101, %v116
    %v122 = vtanh.pop %v118
    %v123 = vtanh.pop %v119
    %v124 = vtanh.pop %v120
    %v125 = vtanh.pop %v121
    %126 = vset.pattern.permute.xlu0 35
    %127 = vperm.xlu0 %126, %v38
    %v128 = vpop.permute.xlu0 %127
    %130 = vset.pattern.permute.xlu0 35
    %131 = vperm.xlu0 %130, %v39
    %v132 = vpop.permute.xlu0 %131
    %134 = vset.pattern.permute.xlu0 35
    %135 = vperm.xlu0 %134, %v40
    %v136 = vpop.permute.xlu0 %135
    %138 = vset.pattern.permute.xlu0 35
    %139 = vperm.xlu0 %138, %v41
    %v140 = vpop.permute.xlu0 %139
    %vm142 = vcmask 261120
    %v143 = vsel %vm142, %v38, 0
    %v145 = vsel %vm142, %v39, 0
    %v147 = vsel %vm142, %v40, 0
    %v149 = vsel %vm142, %v41, 0
    %151 = vmatprep.subr.mxu0 0.0
    %v152 = vand.u32 %v122, 4294901760
    %153 = vmatpush1.msra.mxu0 %v152
    %154 = vmatprep.subr.mxu0 0.0
    %v155 = vand.u32 %v123, 4294901760
    %156 = vmatpush1.msra.mxu0 %v155
    %157 = vmatprep.subr.mxu0 0.0
    %v158 = vand.u32 %v124, 4294901760
    %159 = vmatpush1.msra.mxu0 %v158
    %160 = vmatprep.subr.mxu0 0.0
    %v161 = vand.u32 %v125, 4294901760
    %162 = vmatpush1.msra.mxu0 %v161
    %163 = vmatprep.subr.mxu0 0.0
    %164 = vmatpush1.msra.mxu0 0.0
    %165 = vmatprep.subr.mxu0 0.0
    %166 = vmatpush1.msra.mxu0 0.0
    %167 = vmatprep.subr.mxu0 0.0
    %168 = vmatpush1.msra.mxu0 0.0
    %169 = vmatprep.subr.mxu0 0.0
    %170 = vmatpush1.msra.mxu0 0.0
    %171 = vmatprep.subr.mxu0 0.0
    %172 = vmatpush1.msra.mxu0 0.0
    %173 = vmatprep.subr.mxu0 0.0
    %174 = vmatpush1.msra.mxu0 0.0
    %175 = vmatprep.subr.mxu0 0.0
    %176 = vmatpush1.msra.mxu0 0.0
    %177 = vmatprep.subr.mxu0 0.0
    %178 = vmatpush1.msra.mxu0 0.0
    %179 = vmatprep.subr.mxu0 0.0
    %180 = vmatpush1.msra.mxu0 0.0
    %181 = vmatprep.subr.mxu0 0.0
    %182 = vmatpush1.msra.mxu0 0.0
    %183 = vmatprep.subr.mxu0 0.0
    %184 = vmatpush1.msra.mxu0 0.0
    %185 = vmatprep.subr.mxu0 0.0
    %186 = vmatpush1.msra.mxu0 0.0
    %187 = vmatprep.subr.mxu0 0.0
    %188 = vmatpush1.msra.mxu0 0.0
    %189 = vmatprep.subr.mxu0 0.0
    %190 = vmatpush1.msra.mxu0 0.0
    %191 = vmatprep.subr.mxu0 0.0
    %192 = vmatpush1.msra.mxu0 0.0
    %193 = vmatprep.subr.mxu0 0.0
    %194 = vmatpush1.msra.mxu0 0.0
    %195 = vmatprep.subr.mxu0 0.0
    %196 = vmatpush1.msra.mxu0 0.0
    %197 = vmatprep.subr.mxu0 0.0
    %198 = vmatpush1.msra.mxu0 0.0
    %199 = vmatprep.subr.mxu0 0.0
    %200 = vmatpush1.msra.mxu0 0.0
    %201 = vmatprep.subr.mxu0 0.0
    %202 = vmatpush1.msra.mxu0 0.0
    %203 = vmatprep.subr.mxu0 0.0
    %204 = vmatpush1.msra.mxu0 0.0
    %205 = vmatprep.subr.mxu0 0.0
    %206 = vmatpush1.msra.mxu0 0.0
    %207 = vmatprep.subr.mxu0 0.0
    %208 = vmatpush1.msra.mxu0 0.0
    %209 = vmatprep.subr.mxu0 0.0
    %210 = vmatpush1.msra.mxu0 0.0
    %211 = vmatprep.subr.mxu0 0.0
    %212 = vmatpush1.msra.mxu0 0.0
    %213 = vmatprep.subr.mxu0 0.0
    %214 = vmatpush1.msra.mxu0 0.0
    %215 = vmatprep.subr.mxu0 0.0
    %216 = vmatpush1.msra.mxu0 0.0
    %217 = vmatprep.subr.mxu0 0.0
    %218 = vmatpush1.msra.mxu0 0.0
    %219 = vmatprep.mubr.f32.mxu0 0.0
    %v220 = vand.u32 %v143, 4294901760
    %v221 = vsub.f32 %v143, %v220
    %v222 = vand.u32 %v221, 4294901760
    %v223 = vsub.f32 %v221, %v222
    %v224 = vand.u32 %v223, 4294901760
    %225 = vmatmul.mubr.f32.gmra.mrb[0].mxu0 %v224
    %v226 = vpop.f32.mrb[0].mxu0
    %v227 = vadd.f32 %v128, %v226
    %v228 = vpop.f32.mrb[0].mxu0
    %229 = vmatprep.mubr.f32.mxu0 0.0
    %v230 = vand.u32 %v145, 4294901760
    %v231 = vsub.f32 %v145, %v230
    %v232 = vand.u32 %v231, 4294901760
    %v233 = vsub.f32 %v231, %v232
    %v234 = vand.u32 %v233, 4294901760
    %235 = vmatmul.mubr.f32.gmra.mrb[0].mxu0 %v234
    %v236 = vpop.f32.mrb[0].mxu0
    %v237 = vadd.f32 %v132, %v236
    %v238 = vpop.f32.mrb[0].mxu0
    %239 = vmatprep.mubr.f32.mxu0 0.0
    %v240 = vand.u32 %v147, 4294901760
    %v241 = vsub.f32 %v147, %v240
    %v242 = vand.u32 %v241, 4294901760
    %v243 = vsub.f32 %v241, %v242
    %v244 = vand.u32 %v243, 4294901760
    %245 = vmatmul.mubr.f32.gmra.mrb[0].mxu0 %v244
    %v246 = vpop.f32.mrb[0].mxu0
    %v247 = vadd.f32 %v136, %v246
    %v248 = vpop.f32.mrb[0].mxu0
    %249 = vmatprep.mubr.f32.mxu0 0.0
    %v250 = vand.u32 %v149, 4294901760
    %v251 = vsub.f32 %v149, %v250
    %v252 = vand.u32 %v251, 4294901760
    %v253 = vsub.f32 %v251, %v252
    %v254 = vand.u32 %v253, 4294901760
    %255 = vmatmul.mubr.f32.gmra.mrb[0].mxu0 %v254
    %v256 = vpop.f32.mrb[0].mxu0
    %v257 = vadd.f32 %v140, %v256
    %v258 = vpop.f32.mrb[0].mxu0
    %259 = vdwg.mxu0
    %260 = vmatprep.subr.mxu0 0.0
    %v261 = vand.u32 %v122, 4294901760
    %v262 = vsub.f32 %v122, %v261
    %v263 = vand.u32 %v262, 4294901760
    %v264 = vsub.f32 %v262, %v263
    %v265 = vand.u32 %v264, 4294901760
    %266 = vmatpush1.msra.mxu0 %v265
    %267 = vmatprep.subr.mxu0 0.0
    %v268 = vand.u32 %v123, 4294901760
    %v269 = vsub.f32 %v123, %v268
    %v270 = vand.u32 %v269, 4294901760
    %v271 = vsub.f32 %v269, %v270
    %v272 = vand.u32 %v271, 4294901760
    %273 = vmatpush1.msra.mxu0 %v272
    %274 = vmatprep.subr.mxu0 0.0
    %v275 = vand.u32 %v124, 4294901760
    %v276 = vsub.f32 %v124, %v275
    %v277 = vand.u32 %v276, 4294901760
    %v278 = vsub.f32 %v276, %v277
    %v279 = vand.u32 %v278, 4294901760
    %280 = vmatpush1.msra.mxu0 %v279
    %281 = vmatprep.subr.mxu0 0.0
    %v282 = vand.u32 %v125, 4294901760
    %v283 = vsub.f32 %v125, %v282
    %v284 = vand.u32 %v283, 4294901760
    %v285 = vsub.f32 %v283, %v284
    %v286 = vand.u32 %v285, 4294901760
    %287 = vmatpush1.msra.mxu0 %v286
    %288 = vmatprep.subr.mxu0 0.0
    %289 = vmatpush1.msra.mxu0 0.0
    %290 = vmatprep.subr.mxu0 0.0
    %291 = vmatpush1.msra.mxu0 0.0
    %292 = vmatprep.subr.mxu0 0.0
    %293 = vmatpush1.msra.mxu0 0.0
    %294 = vmatprep.subr.mxu0 0.0
    %295 = vmatpush1.msra.mxu0 0.0
    %296 = vmatprep.subr.mxu0 0.0
    %297 = vmatpush1.msra.mxu0 0.0
    %298 = vmatprep.subr.mxu0 0.0
    %299 = vmatpush1.msra.mxu0 0.0
    %300 = vmatprep.subr.mxu0 0.0
    %301 = vmatpush1.msra.mxu0 0.0
    %302 = vmatprep.subr.mxu0 0.0
    %303 = vmatpush1.msra.mxu0 0.0
    %304 = vmatprep.subr.mxu0 0.0
    %305 = vmatpush1.msra.mxu0 0.0
    %306 = vmatprep.subr.mxu0 0.0
    %307 = vmatpush1.msra.mxu0 0.0
    %308 = vmatprep.subr.mxu0 0.0
    %309 = vmatpush1.msra.mxu0 0.0
    %310 = vmatprep.subr.mxu0 0.0
    %311 = vmatpush1.msra.mxu0 0.0
    %312 = vmatprep.subr.mxu0 0.0
    %313 = vmatpush1.msra.mxu0 0.0
    %314 = vmatprep.subr.mxu0 0.0
    %315 = vmatpush1.msra.mxu0 0.0
    %316 = vmatprep.subr.mxu0 0.0
    %317 = vmatpush1.msra.mxu0 0.0
    %318 = vmatprep.subr.mxu0 0.0
    %319 = vmatpush1.msra.mxu0 0.0
    %320 = vmatprep.subr.mxu0 0.0
    %321 = vmatpush1.msra.mxu0 0.0
    %322 = vmatprep.subr.mxu0 0.0
    %323 = vmatpush1.msra.mxu0 0.0
    %324 = vmatprep.subr.mxu0 0.0
    %325 = vmatpush1.msra.mxu0 0.0
    %326 = vmatprep.subr.mxu0 0.0
    %327 = vmatpush1.msra.mxu0 0.0
    %328 = vmatprep.subr.mxu0 0.0
    %329 = vmatpush1.msra.mxu0 0.0
    %330 = vmatprep.subr.mxu0 0.0
    %331 = vmatpush1.msra.mxu0 0.0
    %332 = vmatprep.subr.mxu0 0.0
    %333 = vmatpush1.msra.mxu0 0.0
    %334 = vmatprep.subr.mxu0 0.0
    %335 = vmatpush1.msra.mxu0 0.0
    %336 = vmatprep.subr.mxu0 0.0
    %337 = vmatpush1.msra.mxu0 0.0
    %338 = vmatprep.subr.mxu0 0.0
    %339 = vmatpush1.msra.mxu0 0.0
    %340 = vmatprep.subr.mxu0 0.0
    %341 = vmatpush1.msra.mxu0 0.0
    %342 = vmatprep.subr.mxu0 0.0
    %343 = vmatpush1.msra.mxu0 0.0
    %344 = vmatprep.mubr.f32.mxu0 0.0
    %v345 = vand.u32 %v143, 4294901760
    %346 = vmatmul.mubr.f32.gmra.mrb[0].mxu0 %v345
    %v347 = vpop.f32.mrb[0].mxu0
    %v348 = vadd.f32 %v227, %v347
    %v349 = vpop.f32.mrb[0].mxu0
    %350 = vmatprep.mubr.f32.mxu0 0.0
    %v351 = vand.u32 %v145, 4294901760
    %352 = vmatmul.mubr.f32.gmra.mrb[0].mxu0 %v351
    %v353 = vpop.f32.mrb[0].mxu0
    %v354 = vadd.f32 %v237, %v353
    %v355 = vpop.f32.mrb[0].mxu0
    %356 = vmatprep.mubr.f32.mxu0 0.0
    %v357 = vand.u32 %v147, 4294901760
    %358 = vmatmul.mubr.f32.gmra.mrb[0].mxu0 %v357
    %v359 = vpop.f32.mrb[0].mxu0
    %v360 = vadd.f32 %v247, %v359
    %v361 = vpop.f32.mrb[0].mxu0
    %362 = vmatprep.mubr.f32.mxu0 0.0
    %v363 = vand.u32 %v149, 4294901760
    %364 = vmatmul.mubr.f32.gmra.mrb[0].mxu0 %v363
    %v365 = vpop.f32.mrb[0].mxu0
    %v366 = vadd.f32 %v257, %v365
    %v367 = vpop.f32.mrb[0].mxu0
    %368 = vdwg.mxu0
    %369 = vmatprep.subr.mxu0 0.0
    %v370 = vand.u32 %v122, 4294901760
    %v371 = vsub.f32 %v122, %v370
    %372 = vmatpush1.msra.mxu0 %v371
    %373 = vmatprep.subr.mxu0 0.0
    %v374 = vand.u32 %v123, 4294901760
    %v375 = vsub.f32 %v123, %v374
    %376 = vmatpush1.msra.mxu0 %v375
    %377 = vmatprep.subr.mxu0 0.0
    %v378 = vand.u32 %v124, 4294901760
    %v379 = vsub.f32 %v124, %v378
    %380 = vmatpush1.msra.mxu0 %v379
    %381 = vmatprep.subr.mxu0 0.0
    %v382 = vand.u32 %v125, 4294901760
    %v383 = vsub.f32 %v125, %v382
    %384 = vmatpush1.msra.mxu0 %v383
    %385 = vmatprep.subr.mxu0 0.0
    %386 = vmatpush1.msra.mxu0 0.0
    %387 = vmatprep.subr.mxu0 0.0
    %388 = vmatpush1.msra.mxu0 0.0
    %389 = vmatprep.subr.mxu0 0.0
    %390 = vmatpush1.msra.mxu0 0.0
    %391 = vmatprep.subr.mxu0 0.0
    %392 = vmatpush1.msra.mxu0 0.0
    %393 = vmatprep.subr.mxu0 0.0
    %394 = vmatpush1.msra.mxu0 0.0
    %395 = vmatprep.subr.mxu0 0.0
    %396 = vmatpush1.msra.mxu0 0.0
    %397 = vmatprep.subr.mxu0 0.0
    %398 = vmatpush1.msra.mxu0 0.0
    %399 = vmatprep.subr.mxu0 0.0
    %400 = vmatpush1.msra.mxu0 0.0
    %401 = vmatprep.subr.mxu0 0.0
    %402 = vmatpush1.msra.mxu0 0.0
    %403 = vmatprep.subr.mxu0 0.0
    %404 = vmatpush1.msra.mxu0 0.0
    %405 = vmatprep.subr.mxu0 0.0
    %406 = vmatpush1.msra.mxu0 0.0
    %407 = vmatprep.subr.mxu0 0.0
    %408 = vmatpush1.msra.mxu0 0.0
    %409 = vmatprep.subr.mxu0 0.0
    %410 = vmatpush1.msra.mxu0 0.0
    %411 = vmatprep.subr.mxu0 0.0
    %412 = vmatpush1.msra.mxu0 0.0
    %413 = vmatprep.subr.mxu0 0.0
    %414 = vmatpush1.msra.mxu0 0.0
    %415 = vmatprep.subr.mxu0 0.0
    %416 = vmatpush1.msra.mxu0 0.0
    %417 = vmatprep.subr.mxu0 0.0
    %418 = vmatpush1.msra.mxu0 0.0
    %419 = vmatprep.subr.mxu0 0.0
    %420 = vmatpush1.msra.mxu0 0.0
    %421 = vmatprep.subr.mxu0 0.0
    %422 = vmatpush1.msra.mxu0 0.0
    %423 = vmatprep.subr.mxu0 0.0
    %424 = vmatpush1.msra.mxu0 0.0
    %425 = vmatprep.subr.mxu0 0.0
    %426 = vmatpush1.msra.mxu0 0.0
    %427 = vmatprep.subr.mxu0 0.0
    %428 = vmatpush1.msra.mxu0 0.0
    %429 = vmatprep.subr.mxu0 0.0
    %430 = vmatpush1.msra.mxu0 0.0
    %431 = vmatprep.subr.mxu0 0.0
    %432 = vmatpush1.msra.mxu0 0.0
    %433 = vmatprep.subr.mxu0 0.0
    %434 = vmatpush1.msra.mxu0 0.0
    %435 = vmatprep.subr.mxu0 0.0
    %436 = vmatpush1.msra.mxu0 0.0
    %437 = vmatprep.subr.mxu0 0.0
    %438 = vmatpush1.msra.mxu0 0.0
    %439 = vmatprep.subr.mxu0 0.0
    %440 = vmatpush1.msra.mxu0 0.0
    %441 = vmatprep.mubr.f32.mxu0 0.0
    %v442 = vand.u32 %v143, 4294901760
    %v443 = vsub.f32 %v143, %v442
    %444 = vmatmul.mubr.f32.gmra.mrb[0].mxu0 %v443
    %v445 = vpop.f32.mrb[0].mxu0
    %v446 = vadd.f32 %v348, %v445
    %v447 = vpop.f32.mrb[0].mxu0
    %448 = vmatprep.mubr.f32.mxu0 0.0
    %v449 = vand.u32 %v145, 4294901760
    %v450 = vsub.f32 %v145, %v449
    %451 = vmatmul.mubr.f32.gmra.mrb[0].mxu0 %v450
    %v452 = vpop.f32.mrb[0].mxu0
    %v453 = vadd.f32 %v354, %v452
    %v454 = vpop.f32.mrb[0].mxu0
    %455 = vmatprep.mubr.f32.mxu0 0.0
    %v456 = vand.u32 %v147, 4294901760
    %v457 = vsub.f32 %v147, %v456
    %458 = vmatmul.mubr.f32.gmra.mrb[0].mxu0 %v457
    %v459 = vpop.f32.mrb[0].mxu0
    %v460 = vadd.f32 %v360, %v459
    %v461 = vpop.f32.mrb[0].mxu0
    %462 = vmatprep.mubr.f32.mxu0 0.0
    %v463 = vand.u32 %v149, 4294901760
    %v464 = vsub.f32 %v149, %v463
    %465 = vmatmul.mubr.f32.gmra.mrb[0].mxu0 %v464
    %v466 = vpop.f32.mrb[0].mxu0
    %v467 = vadd.f32 %v366, %v466
    %v468 = vpop.f32.mrb[0].mxu0
    %469 = vdwg.mxu0
    %470 = vmatprep.subr.mxu0 0.0
    %v471 = vand.u32 %v122, 4294901760
    %472 = vmatpush1.msra.mxu0 %v471
    %473 = vmatprep.subr.mxu0 0.0
    %v474 = vand.u32 %v123, 4294901760
    %475 = vmatpush1.msra.mxu0 %v474
    %476 = vmatprep.subr.mxu0 0.0
    %v477 = vand.u32 %v124, 4294901760
    %478 = vmatpush1.msra.mxu0 %v477
    %479 = vmatprep.subr.mxu0 0.0
    %v480 = vand.u32 %v125, 4294901760
    %481 = vmatpush1.msra.mxu0 %v480
    %482 = vmatprep.subr.mxu0 0.0
    %483 = vmatpush1.msra.mxu0 0.0
    %484 = vmatprep.subr.mxu0 0.0
    %485 = vmatpush1.msra.mxu0 0.0
    %486 = vmatprep.subr.mxu0 0.0
    %487 = vmatpush1.msra.mxu0 0.0
    %488 = vmatprep.subr.mxu0 0.0
    %489 = vmatpush1.msra.mxu0 0.0
    %490 = vmatprep.subr.mxu0 0.0
    %491 = vmatpush1.msra.mxu0 0.0
    %492 = vmatprep.subr.mxu0 0.0
    %493 = vmatpush1.msra.mxu0 0.0
    %494 = vmatprep.subr.mxu0 0.0
    %495 = vmatpush1.msra.mxu0 0.0
    %496 = vmatprep.subr.mxu0 0.0
    %497 = vmatpush1.msra.mxu0 0.0
    %498 = vmatprep.subr.mxu0 0.0
    %499 = vmatpush1.msra.mxu0 0.0
    %500 = vmatprep.subr.mxu0 0.0
    %501 = vmatpush1.msra.mxu0 0.0
    %502 = vmatprep.subr.mxu0 0.0
    %503 = vmatpush1.msra.mxu0 0.0
    %504 = vmatprep.subr.mxu0 0.0
    %505 = vmatpush1.msra.mxu0 0.0
    %506 = vmatprep.subr.mxu0 0.0
    %507 = vmatpush1.msra.mxu0 0.0
    %508 = vmatprep.subr.mxu0 0.0
    %509 = vmatpush1.msra.mxu0 0.0
    %510 = vmatprep.subr.mxu0 0.0
    %511 = vmatpush1.msra.mxu0 0.0
    %512 = vmatprep.subr.mxu0 0.0
    %513 = vmatpush1.msra.mxu0 0.0
    %514 = vmatprep.subr.mxu0 0.0
    %515 = vmatpush1.msra.mxu0 0.0
    %516 = vmatprep.subr.mxu0 0.0
    %517 = vmatpush1.msra.mxu0 0.0
    %518 = vmatprep.subr.mxu0 0.0
    %519 = vmatpush1.msra.mxu0 0.0
    %520 = vmatprep.subr.mxu0 0.0
    %521 = vmatpush1.msra.mxu0 0.0
    %522 = vmatprep.subr.mxu0 0.0
    %523 = vmatpush1.msra.mxu0 0.0
    %524 = vmatprep.subr.mxu0 0.0
    %525 = vmatpush1.msra.mxu0 0.0
    %526 = vmatprep.subr.mxu0 0.0
    %527 = vmatpush1.msra.mxu0 0.0
    %528 = vmatprep.subr.mxu0 0.0
    %529 = vmatpush1.msra.mxu0 0.0
    %530 = vmatprep.subr.mxu0 0.0
    %531 = vmatpush1.msra.mxu0 0.0
    %532 = vmatprep.subr.mxu0 0.0
    %533 = vmatpush1.msra.mxu0 0.0
    %534 = vmatprep.subr.mxu0 0.0
    %535 = vmatpush1.msra.mxu0 0.0
    %536 = vmatprep.subr.mxu0 0.0
    %537 = vmatpush1.msra.mxu0 0.0
    %538 = vmatprep.mubr.f32.mxu0 0.0
    %v539 = vand.u32 %v143, 4294901760
    %v540 = vsub.f32 %v143, %v539
    %v541 = vand.u32 %v540, 4294901760
    %542 = vmatmul.mubr.f32.gmra.mrb[0].mxu0 %v541
    %v543 = vpop.f32.mrb[0].mxu0
    %v544 = vadd.f32 %v446, %v543
    %v545 = vpop.f32.mrb[0].mxu0
    %546 = vmatprep.mubr.f32.mxu0 0.0
    %v547 = vand.u32 %v145, 4294901760
    %v548 = vsub.f32 %v145, %v547
    %v549 = vand.u32 %v548, 4294901760
    %550 = vmatmul.mubr.f32.gmra.mrb[0].mxu0 %v549
    %v551 = vpop.f32.mrb[0].mxu0
    %v552 = vadd.f32 %v453, %v551
    %v553 = vpop.f32.mrb[0].mxu0
    %554 = vmatprep.mubr.f32.mxu0 0.0
    %v555 = vand.u32 %v147, 4294901760
    %v556 = vsub.f32 %v147, %v555
    %v557 = vand.u32 %v556, 4294901760
    %558 = vmatmul.mubr.f32.gmra.mrb[0].mxu0 %v557
    %v559 = vpop.f32.mrb[0].mxu0
    %v560 = vadd.f32 %v460, %v559
    %v561 = vpop.f32.mrb[0].mxu0
    %562 = vmatprep.mubr.f32.mxu0 0.0
    %v563 = vand.u32 %v149, 4294901760
    %v564 = vsub.f32 %v149, %v563
    %v565 = vand.u32 %v564, 4294901760
    %566 = vmatmul.mubr.f32.gmra.mrb[0].mxu0 %v565
    %v567 = vpop.f32.mrb[0].mxu0
    %v568 = vadd.f32 %v467, %v567
    %v569 = vpop.f32.mrb[0].mxu0
    %570 = vdwg.mxu0
    %571 = vmatprep.subr.mxu0 0.0
    %v572 = vand.u32 %v122, 4294901760
    %v573 = vsub.f32 %v122, %v572
    %v574 = vand.u32 %v573, 4294901760
    %575 = vmatpush1.msra.mxu0 %v574
    %576 = vmatprep.subr.mxu0 0.0
    %v577 = vand.u32 %v123, 4294901760
    %v578 = vsub.f32 %v123, %v577
    %v579 = vand.u32 %v578, 4294901760
    %580 = vmatpush1.msra.mxu0 %v579
    %581 = vmatprep.subr.mxu0 0.0
    %v582 = vand.u32 %v124, 4294901760
    %v583 = vsub.f32 %v124, %v582
    %v584 = vand.u32 %v583, 4294901760
    %585 = vmatpush1.msra.mxu0 %v584
    %586 = vmatprep.subr.mxu0 0.0
    %v587 = vand.u32 %v125, 4294901760
    %v588 = vsub.f32 %v125, %v587
    %v589 = vand.u32 %v588, 4294901760
    %590 = vmatpush1.msra.mxu0 %v589
    %591 = vmatprep.subr.mxu0 0.0
    %592 = vmatpush1.msra.mxu0 0.0
    %593 = vmatprep.subr.mxu0 0.0
    %594 = vmatpush1.msra.mxu0 0.0
    %595 = vmatprep.subr.mxu0 0.0
    %596 = vmatpush1.msra.mxu0 0.0
    %597 = vmatprep.subr.mxu0 0.0
    %598 = vmatpush1.msra.mxu0 0.0
    %599 = vmatprep.subr.mxu0 0.0
    %600 = vmatpush1.msra.mxu0 0.0
    %601 = vmatprep.subr.mxu0 0.0
    %602 = vmatpush1.msra.mxu0 0.0
    %603 = vmatprep.subr.mxu0 0.0
    %604 = vmatpush1.msra.mxu0 0.0
    %605 = vmatprep.subr.mxu0 0.0
    %606 = vmatpush1.msra.mxu0 0.0
    %607 = vmatprep.subr.mxu0 0.0
    %608 = vmatpush1.msra.mxu0 0.0
    %609 = vmatprep.subr.mxu0 0.0
    %610 = vmatpush1.msra.mxu0 0.0
    %611 = vmatprep.subr.mxu0 0.0
    %612 = vmatpush1.msra.mxu0 0.0
    %613 = vmatprep.subr.mxu0 0.0
    %614 = vmatpush1.msra.mxu0 0.0
    %615 = vmatprep.subr.mxu0 0.0
    %616 = vmatpush1.msra.mxu0 0.0
    %617 = vmatprep.subr.mxu0 0.0
    %618 = vmatpush1.msra.mxu0 0.0
    %619 = vmatprep.subr.mxu0 0.0
    %620 = vmatpush1.msra.mxu0 0.0
    %621 = vmatprep.subr.mxu0 0.0
    %622 = vmatpush1.msra.mxu0 0.0
    %623 = vmatprep.subr.mxu0 0.0
    %624 = vmatpush1.msra.mxu0 0.0
    %625 = vmatprep.subr.mxu0 0.0
    %626 = vmatpush1.msra.mxu0 0.0
    %627 = vmatprep.subr.mxu0 0.0
    %628 = vmatpush1.msra.mxu0 0.0
    %629 = vmatprep.subr.mxu0 0.0
    %630 = vmatpush1.msra.mxu0 0.0
    %631 = vmatprep.subr.mxu0 0.0
    %632 = vmatpush1.msra.mxu0 0.0
    %633 = vmatprep.subr.mxu0 0.0
    %634 = vmatpush1.msra.mxu0 0.0
    %635 = vmatprep.subr.mxu0 0.0
    %636 = vmatpush1.msra.mxu0 0.0
    %637 = vmatprep.subr.mxu0 0.0
    %638 = vmatpush1.msra.mxu0 0.0
    %639 = vmatprep.subr.mxu0 0.0
    %640 = vmatpush1.msra.mxu0 0.0
    %641 = vmatprep.subr.mxu0 0.0
    %642 = vmatpush1.msra.mxu0 0.0
    %643 = vmatprep.subr.mxu0 0.0
    %644 = vmatpush1.msra.mxu0 0.0
    %645 = vmatprep.subr.mxu0 0.0
    %646 = vmatpush1.msra.mxu0 0.0
    %647 = vmatprep.mubr.f32.mxu0 0.0
    %v648 = vand.u32 %v143, 4294901760
    %649 = vmatmul.mubr.f32.gmra.mrb[0].mxu0 %v648
    %v650 = vpop.f32.mrb[0].mxu0
    %v651 = vadd.f32 %v544, %v650
    %v652 = vpop.f32.mrb[0].mxu0
    %653 = vmatprep.mubr.f32.mxu0 0.0
    %v654 = vand.u32 %v145, 4294901760
    %655 = vmatmul.mubr.f32.gmra.mrb[0].mxu0 %v654
    %v656 = vpop.f32.mrb[0].mxu0
    %v657 = vadd.f32 %v552, %v656
    %v658 = vpop.f32.mrb[0].mxu0
    %659 = vmatprep.mubr.f32.mxu0 0.0
    %v660 = vand.u32 %v147, 4294901760
    %661 = vmatmul.mubr.f32.gmra.mrb[0].mxu0 %v660
    %v662 = vpop.f32.mrb[0].mxu0
    %v663 = vadd.f32 %v560, %v662
    %v664 = vpop.f32.mrb[0].mxu0
    %665 = vmatprep.mubr.f32.mxu0 0.0
    %v666 = vand.u32 %v149, 4294901760
    %667 = vmatmul.mubr.f32.gmra.mrb[0].mxu0 %v666
    %v668 = vpop.f32.mrb[0].mxu0
    %v669 = vadd.f32 %v568, %v668
    %v670 = vpop.f32.mrb[0].mxu0
    %671 = vdwg.mxu0
    %672 = vmatprep.subr.mxu0 0.0
    %v673 = vand.u32 %v122, 4294901760
    %674 = vmatpush1.msra.mxu0 %v673
    %675 = vmatprep.subr.mxu0 0.0
    %v676 = vand.u32 %v123, 4294901760
    %677 = vmatpush1.msra.mxu0 %v676
    %678 = vmatprep.subr.mxu0 0.0
    %v679 = vand.u32 %v124, 4294901760
    %680 = vmatpush1.msra.mxu0 %v679
    %681 = vmatprep.subr.mxu0 0.0
    %v682 = vand.u32 %v125, 4294901760
    %683 = vmatpush1.msra.mxu0 %v682
    %684 = vmatprep.subr.mxu0 0.0
    %685 = vmatpush1.msra.mxu0 0.0
    %686 = vmatprep.subr.mxu0 0.0
    %687 = vmatpush1.msra.mxu0 0.0
    %688 = vmatprep.subr.mxu0 0.0
    %689 = vmatpush1.msra.mxu0 0.0
    %690 = vmatprep.subr.mxu0 0.0
    %691 = vmatpush1.msra.mxu0 0.0
    %692 = vmatprep.subr.mxu0 0.0
    %693 = vmatpush1.msra.mxu0 0.0
    %694 = vmatprep.subr.mxu0 0.0
    %695 = vmatpush1.msra.mxu0 0.0
    %696 = vmatprep.subr.mxu0 0.0
    %697 = vmatpush1.msra.mxu0 0.0
    %698 = vmatprep.subr.mxu0 0.0
    %699 = vmatpush1.msra.mxu0 0.0
    %700 = vmatprep.subr.mxu0 0.0
    %701 = vmatpush1.msra.mxu0 0.0
    %702 = vmatprep.subr.mxu0 0.0
    %703 = vmatpush1.msra.mxu0 0.0
    %704 = vmatprep.subr.mxu0 0.0
    %705 = vmatpush1.msra.mxu0 0.0
    %706 = vmatprep.subr.mxu0 0.0
    %707 = vmatpush1.msra.mxu0 0.0
    %708 = vmatprep.subr.mxu0 0.0
    %709 = vmatpush1.msra.mxu0 0.0
    %710 = vmatprep.subr.mxu0 0.0
    %711 = vmatpush1.msra.mxu0 0.0
    %712 = vmatprep.subr.mxu0 0.0
    %713 = vmatpush1.msra.mxu0 0.0
    %714 = vmatprep.subr.mxu0 0.0
    %715 = vmatpush1.msra.mxu0 0.0
    %716 = vmatprep.subr.mxu0 0.0
    %717 = vmatpush1.msra.mxu0 0.0
    %718 = vmatprep.subr.mxu0 0.0
    %719 = vmatpush1.msra.mxu0 0.0
    %720 = vmatprep.subr.mxu0 0.0
    %721 = vmatpush1.msra.mxu0 0.0
    %722 = vmatprep.subr.mxu0 0.0
    %723 = vmatpush1.msra.mxu0 0.0
    %724 = vmatprep.subr.mxu0 0.0
    %725 = vmatpush1.msra.mxu0 0.0
    %726 = vmatprep.subr.mxu0 0.0
    %727 = vmatpush1.msra.mxu0 0.0
    %728 = vmatprep.subr.mxu0 0.0
    %729 = vmatpush1.msra.mxu0 0.0
    %730 = vmatprep.subr.mxu0 0.0
    %731 = vmatpush1.msra.mxu0 0.0
    %732 = vmatprep.subr.mxu0 0.0
    %733 = vmatpush1.msra.mxu0 0.0
    %734 = vmatprep.subr.mxu0 0.0
    %735 = vmatpush1.msra.mxu0 0.0
    %736 = vmatprep.subr.mxu0 0.0
    %737 = vmatpush1.msra.mxu0 0.0
    %738 = vmatprep.subr.mxu0 0.0
    %739 = vmatpush1.msra.mxu0 0.0
    %740 = vmatprep.mubr.f32.mxu0 0.0
    %v741 = vand.u32 %v143, 4294901760
    %742 = vmatmul.mubr.f32.gmra.mrb[0].mxu0 %v741
    %v743 = vpop.f32.mrb[0].mxu0
    %v744 = vadd.f32 %v651, %v743
    %v745 = vpop.f32.mrb[0].mxu0
    %746 = vmatprep.mubr.f32.mxu0 0.0
    %v747 = vand.u32 %v145, 4294901760
    %748 = vmatmul.mubr.f32.gmra.mrb[0].mxu0 %v747
    %v749 = vpop.f32.mrb[0].mxu0
    %v750 = vadd.f32 %v657, %v749
    %v751 = vpop.f32.mrb[0].mxu0
    %752 = vmatprep.mubr.f32.mxu0 0.0
    %v753 = vand.u32 %v147, 4294901760
    %754 = vmatmul.mubr.f32.gmra.mrb[0].mxu0 %v753
    %v755 = vpop.f32.mrb[0].mxu0
    %v756 = vadd.f32 %v663, %v755
    %v757 = vpop.f32.mrb[0].mxu0
    %758 = vmatprep.mubr.f32.mxu0 0.0
    %v759 = vand.u32 %v149, 4294901760
    %760 = vmatmul.mubr.f32.gmra.mrb[0].mxu0 %v759
    %v761 = vpop.f32.mrb[0].mxu0
    %v762 = vadd.f32 %v669, %v761
    %v763 = vpop.f32.mrb[0].mxu0
    %764 = vdwg.mxu0
    %v765 = vtanh.pop %v744
    %v766 = vtanh.pop %v750
    %v767 = vtanh.pop %v756
    %v768 = vtanh.pop %v762
    %769 = vset.pattern.permute.xlu0 36
    %770 = vperm.xlu0 %769, %v38
    %v771 = vpop.permute.xlu0 %770
    %773 = vset.pattern.permute.xlu0 36
    %774 = vperm.xlu0 %773, %v39
    %v775 = vpop.permute.xlu0 %774
    %777 = vset.pattern.permute.xlu0 36
    %778 = vperm.xlu0 %777, %v40
    %v779 = vpop.permute.xlu0 %778
    %781 = vset.pattern.permute.xlu0 36
    %782 = vperm.xlu0 %781, %v41
    %v783 = vpop.permute.xlu0 %782
    %v785 = vmul.f32 %v771, %v765
    %v786 = vmul.f32 %v775, %v766
    %v787 = vmul.f32 %v779, %v767
    %v788 = vmul.f32 %v783, %v768
    %vm789 = vcmask 130048
    %v790 = vsel %vm789, %v785, 0.0
    %v791 = vsel %vm789, %v786, 0.0
    %v792 = vadd.f32 %v790, %v791
    %v793 = vsel %vm789, %v787, 0.0
    %v794 = vadd.f32 %v792, %v793
    %v795 = vsel %vm789, %v788, 0.0
    %v796 = vadd.f32 %v794, %v795
    %v797 = vrot.slane %v796, 4
    %v798 = vadd.f32 %v796, %v797
    %v799 = vrot.slane %v798, 2
    %v800 = vadd.f32 %v798, %v799
    %v801 = vrot.slane %v800, 1
    %v802 = vadd.f32 %v800, %v801
    %804 = vset.pattern.permute.xlu0 38
    %805 = vperm.xlu0 %804, %v42
    %v806 = vpop.permute.xlu0 %805
    %v808 = vadd.f32 %v802, %v806
    %809 = vset.pattern.permute.xlu0 37
    %810 = vperm.xlu0 %809, %v38
    %v811 = vpop.permute.xlu0 %810
    %813 = vset.pattern.permute.xlu0 37
    %814 = vperm.xlu0 %813, %v39
    %v815 = vpop.permute.xlu0 %814
    %817 = vset.pattern.permute.xlu0 37
    %818 = vperm.xlu0 %817, %v40
    %v819 = vpop.permute.xlu0 %818
    %821 = vset.pattern.permute.xlu0 37
    %822 = vperm.xlu0 %821, %v41
    %v823 = vpop.permute.xlu0 %822
    %v825 = vmul.f32 %v811, %v765
    %v826 = vmul.f32 %v815, %v766
    %v827 = vmul.f32 %v819, %v767
    %v828 = vmul.f32 %v823, %v768
    %v829 = vsel %vm789, %v825, 0.0
    %v830 = vsel %vm789, %v826, 0.0
    %v831 = vadd.f32 %v829, %v830
    %v832 = vsel %vm789, %v827, 0.0
    %v833 = vadd.f32 %v831, %v832
    %v834 = vsel %vm789, %v828, 0.0
    %v835 = vadd.f32 %v833, %v834
    %v836 = vrot.slane %v835, 4
    %v837 = vadd.f32 %v835, %v836
    %v838 = vrot.slane %v837, 2
    %v839 = vadd.f32 %v837, %v838
    %v840 = vrot.slane %v839, 1
    %v841 = vadd.f32 %v839, %v840
    %843 = vset.pattern.permute.xlu0 38
    %844 = vperm.xlu0 %843, %v43
    %v845 = vpop.permute.xlu0 %844
    %v847 = vadd.f32 %v841, %v845
    %v848 = vadd.f32 %v44, %v808
    %vm849 = vcmask 122880
    %850 = vst.msk [vmem:[#allocation7] sm:$0x1] %vm849, %v848
    %v851 = vadd.f32 %v45, %v847
    %852 = vst.msk [vmem:[#allocation7 + $0x1] sm:$0x1] %vm849, %v851
    // Predicated region
    $region18: #{tpu_custom_call.1} parent=1 // pred_check
      _
    $region19: #{tpu_custom_call.1} parent=1 // pred_check_branch
      %854 = sbr.rel (0) target = $region21
    $region20: #{tpu_custom_call.1} parent=1 // pred_region
      %s856 = ssub.s32 32, 32
      %857 = vsyncadd [#allocation4], %s856
      %s859 = sshll.u32 [#allocation7], 4
      %s860 = int_to_ptr.vmem [resolvable:$true] %s859
      %862 = dma.vmem_to_hbm [thread:$0]  %s860, 32, %s2, [#allocation4]
    $region21: #{tpu_custom_call.1} parent=1 // pred_fallthru
      _
    // Predicated region
    $region22: #{tpu_custom_call.1} parent=1 // pred_check
      _
    $region23: #{tpu_custom_call.1} parent=1 // pred_check_branch
      %864 = sbr.rel (0) target = $region25
    $region24: #{tpu_custom_call.1} parent=1 // pred_region
      %865 = dma.done [#allocation4], 32
    $region25: #{tpu_custom_call.1} parent=1 // pred_fallthru
      _
    %866 = vsyncpa [#allocation3], 1
    %867 = vsyncpa [#allocation6], 1
    %868 = vsyncpa [#allocation4], 1

</llo_original>
